<compile_context>
chip_gen: v6e
topology: v6e:2x2x1
jax: 0.10.0
libtpu: 0.0.40
codegen_flags: <defaults>
</compile_context>

<pallas_src>
import functools

import jax
import jax.numpy as jnp
from jax.experimental import pallas as pl
from jax.experimental.pallas import tpu as pltpu


def _round_up(a, b):
    return (a + b - 1) // b * b


def _round_down(a, b):
    return (a // b) * b


def _tpu_vmem_and_cores():
    """Returns (per-core VMEM capacity bytes, has_two_tensorcores)."""
    vmem = 128 * 1024 * 1024
    try:
        info = pltpu.get_tpu_info()
        vmem = int(getattr(info, "vmem_capacity_bytes", vmem))
    except Exception:
        pass
    two_cores = vmem <= 64 * 1024 * 1024  # v7x: 64 MiB/TC, 2 TCs per chip.
    try:
        kind = jax.devices()[0].device_kind.lower()
        if "v7" in kind or "7x" in kind:
            two_cores = True
    except Exception:
        pass
    return vmem, two_cores


def _row_align(itemsize):
    # Sub-32-bit dtypes pack along sublanes -> larger second-to-last alignment.
    return {4: 8, 2: 16, 1: 32}.get(itemsize, 8)


def _tile_bytes(tm, tk, hidden, itemsize, with_acc):
    """Approximate double-buffered VMEM footprint of one grid step."""
    b = 2 * tm * hidden * itemsize           # x block
    b += 2 * tm * hidden * itemsize          # out block
    b += 2 * hidden * tk * itemsize          # W1 slice
    b += 2 * tk * hidden * itemsize          # W2 slice
    b += 2 * tk * itemsize                   # b1 slice
    b += 6 * hidden * itemsize               # b2 / gamma / beta
    if with_acc:
        b += tm * hidden * 4                 # f32 accumulator scratch
    return b


def _row_tile_candidates(rows, align, two_cores):
    cap = min(_round_up(rows, align), 1024)
    if two_cores and rows > 256:
        # Keep >= 2 row grid steps so both v7x TensorCores get work.
        cap = min(cap, max(128, _round_up((rows + 1) // 2, 128)))
    cands = []
    t = cap
    while t >= align:
        cands.append(t)
        t = _round_down(t // 2, align)
    if not cands:
        cands = [align]
    return cands


def _k_tile_candidates(inter):
    cands = [inter]                          # nk == 1 fast path first.
    d = _round_down(inter, 128)
    while d >= 128:
        if inter % d == 0 and d != inter:
            cands.append(d)
        d -= 128
    return cands


def _pick_tiles(rows, hidden, inter, itemsize, budget, two_cores):
    tm_cands = _row_tile_candidates(rows, _row_align(itemsize), two_cores)
    k_cands = _k_tile_candidates(inter)
    for tk in k_cands:                       # fewest K steps first
        with_acc = tk != inter
        for tm in tm_cands:                  # biggest row tile that fits
            if _tile_bytes(tm, tk, hidden, itemsize, with_acc) <= budget:
                return tm, tk
    return tm_cands[-1], k_cands[-1]


# ----------------------------- kernels ---------------------------------------


def _ffn_fused_kernel(x_ref, w1_ref, b1_ref, w2_ref, b2_ref,
                      gamma_ref, beta_ref, o_ref, *, eps):
    """Single-K-step path: no accumulator scratch, one store to o_ref."""
    x = x_ref[...]
    h = jnp.dot(x, w1_ref[...], preferred_element_type=jnp.float32)
    h = jnp.maximum(h + b1_ref[...].astype(jnp.float32), 0.0)
    y = jnp.dot(h.astype(w2_ref.dtype), w2_ref[...],
                preferred_element_type=jnp.float32)
    y = y + b2_ref[...].astype(jnp.float32) + x.astype(jnp.float32)
    mean = jnp.mean(y, axis=-1, keepdims=True)
    c = y - mean
    var = jnp.mean(c * c, axis=-1, keepdims=True)
    out = (c * jax.lax.rsqrt(var + eps) * gamma_ref[...].astype(jnp.float32)
           + beta_ref[...].astype(jnp.float32))
    o_ref[...] = out.astype(o_ref.dtype)


def _ffn_ktiled_kernel(x_ref, w1_ref, b1_ref, w2_ref, b2_ref,
                       gamma_ref, beta_ref, o_ref, acc_ref, *, eps):
    """K-tiled path: intermediate dim streams through VMEM, f32 accumulator."""
    k = pl.program_id(1)
    nk = pl.num_programs(1)

    @pl.when(k == 0)
    def _init():
        # Residual + b2 folded into the init (free under the W1/W2 prefetch).
        acc_ref[...] = (x_ref[...].astype(jnp.float32)
                        + b2_ref[...].astype(jnp.float32))

    h = jnp.dot(x_ref[...], w1_ref[...], preferred_element_type=jnp.float32)
    h = jnp.maximum(h + b1_ref[...].astype(jnp.float32), 0.0)
    acc_ref[...] += jnp.dot(h.astype(w2_ref.dtype), w2_ref[...],
                            preferred_element_type=jnp.float32)

    @pl.when(k == nk - 1)
    def _finalize():
        y = acc_ref[...]
        mean = jnp.mean(y, axis=-1, keepdims=True)
        c = y - mean
        var = jnp.mean(c * c, axis=-1, keepdims=True)
        out = (c * jax.lax.rsqrt(var + eps) * gamma_ref[...].astype(jnp.float32)
               + beta_ref[...].astype(jnp.float32))
        o_ref[...] = out.astype(o_ref.dtype)


def _seg_sum(v, seg):
    """Segmented (per-token) lane sum via block-diagonal ones matrix on the MXU.

    hi/lo split keeps the result accurate to ~f32 even if the backend truncates
    matmul inputs to bf16 (seg is exactly representable; the residual is tiny).
    """
    v_hi = v.astype(jnp.bfloat16).astype(jnp.float32)
    v_lo = v - v_hi
    return (jnp.dot(v_hi, seg, preferred_element_type=jnp.float32)
            + jnp.dot(v_lo, seg, preferred_element_type=jnp.float32))


def _ffn_packed_kernel(x_ref, w1_ref, b1_ref, w2_ref, b2_ref,
                       gamma_ref, beta_ref, seg_ref, o_ref, *, eps, inv_h):
    """Lane-packed path for hidden < 128: p = 128 // hidden tokens per 128-lane
    row, block-diagonal weights, segmented (per-token) LayerNorm."""
    x = x_ref[...]                                                  # (TM, 128)
    h = jnp.dot(x, w1_ref[...], preferred_element_type=jnp.float32)
    h = jnp.maximum(h + b1_ref[...].astype(jnp.float32), 0.0)       # (TM, p*I)
    y = jnp.dot(h.astype(w2_ref.dtype), w2_ref[...],
                preferred_element_type=jnp.float32)
    y = y + b2_ref[...].astype(jnp.float32) + x.astype(jnp.float32)  # (TM, 128)
    seg = seg_ref[...]                                # (128,128) block-diag 1s
    mean = _seg_sum(y, seg) * inv_h                   # per-token mean, broadcast
    c = y - mean
    var = _seg_sum(c * c, seg) * inv_h
    out = (c * jax.lax.rsqrt(var + eps) * gamma_ref[...].astype(jnp.float32)
           + beta_ref[...].astype(jnp.float32))
    o_ref[...] = out.astype(o_ref.dtype)


# ----------------------------- wrapper ----------------------------------------


def ffn_adapter_forward(x, w1, b1, w2, b2, gamma, beta, *, eps,
                        max_k_tile=None):
    """FFNAdapter forward: LayerNorm(relu(x @ W1 + b1) @ W2 + b2 + x).

    x: (batch, seq, hidden).  w1: (H, I) (pre-transposed vs. PyTorch's (out,in)),
    b1: (I,), w2: (I, H), b2: (H,), gamma/beta: (H,).  Returns (batch, seq, H).
    """
    batch, seq, hidden = x.shape
    inter = w1.shape[1]
    rows = batch * seq
    itemsize = jnp.dtype(x.dtype).itemsize

    vmem_cap, two_cores = _tpu_vmem_and_cores()
    vmem_limit = min(64 * 1024 * 1024, int(0.75 * vmem_cap))
    budget = int(0.8 * vmem_limit)

    x2d = x.reshape(rows, hidden)

    # ------------------- lane-packed path: hidden < 128 ----------------------
    p = 128 // hidden if (hidden < 128 and 128 % hidden == 0) else 1
    hp, ip = p * hidden, p * inter
    packed_w_bytes = 2 * 2 * hp * ip * itemsize + 2 * hp * hp * 4
    if p > 1 and max_k_tile is None and packed_w_bytes <= budget // 2:
        rows_g = _round_up(rows, p)
        if rows_g != rows:
            x2d = jnp.pad(x2d, ((0, rows_g - rows), (0, 0)))
        prow = rows_g // p
        xp = x2d.reshape(prow, hp)            # p consecutive tokens per row

        align = _row_align(itemsize)
        tm = align
        for cand in _row_tile_candidates(prow, align, two_cores):
            if _tile_bytes(cand, ip, hp, itemsize, False) + 2 * hp * hp * 4 <= budget:
                tm = cand
                break
        prow_p = _round_up(prow, tm)
        if prow_p != prow:
            xp = jnp.pad(xp, ((0, prow_p - prow), (0, 0)))

        eye = jnp.eye(p, dtype=w1.dtype)
        w1p = jnp.kron(eye, w1)                              # (hp, ip) block-diag
        w2p = jnp.kron(eye, w2)                              # (ip, hp) block-diag
        b1p = jnp.tile(b1, p).reshape(1, ip)
        b2p = jnp.tile(b2, p).reshape(1, hp)
        gammap = jnp.tile(gamma, p).reshape(1, hp)
        betap = jnp.tile(beta, p).reshape(1, hp)
        seg = jnp.kron(jnp.eye(p, dtype=jnp.float32),
                       jnp.ones((hidden, hidden), jnp.float32))  # (hp, hp)

        out_p = pl.pallas_call(
            functools.partial(_ffn_packed_kernel, eps=eps, inv_h=1.0 / hidden),
            out_shape=jax.ShapeDtypeStruct((prow_p, hp), x.dtype),
            grid_spec=pltpu.PrefetchScalarGridSpec(
                num_scalar_prefetch=0,
                grid=(prow_p // tm,),
                in_specs=[
                    pl.BlockSpec((tm, hp), lambda i: (i, 0)),    # packed x
                    pl.BlockSpec((hp, ip), lambda i: (0, 0)),    # W1 block-diag
                    pl.BlockSpec((1, ip), lambda i: (0, 0)),     # b1
                    pl.BlockSpec((ip, hp), lambda i: (0, 0)),    # W2 block-diag
                    pl.BlockSpec((1, hp), lambda i: (0, 0)),     # b2
                    pl.BlockSpec((1, hp), lambda i: (0, 0)),     # gamma
                    pl.BlockSpec((1, hp), lambda i: (0, 0)),     # beta
                    pl.BlockSpec((hp, hp), lambda i: (0, 0)),    # LN segment mat
                ],
                out_specs=pl.BlockSpec((tm, hp), lambda i: (i, 0)),
            ),
            compiler_params=pltpu.CompilerParams(
                dimension_semantics=("parallel",),
                vmem_limit_bytes=vmem_limit,
            ),
        )(xp, w1p, b1p, w2p, b2p, gammap, betap, seg)

        out2d = out_p[:prow].reshape(rows_g, hidden)[:rows]
        return out2d.reshape(batch, seq, hidden)

    # ------------------------- general path ----------------------------------
    tm, tk = _pick_tiles(rows, hidden, inter, itemsize, budget, two_cores)
    if max_k_tile is not None:
        cands = [c for c in _k_tile_candidates(inter) if c <= max_k_tile]
        tk = max(cands) if cands else min(_k_tile_candidates(inter))

    rows_p = _round_up(rows, tm)
    if rows_p != rows:
        # Zero-padded rows give finite LayerNorm output and are sliced off.
        x2d = jnp.pad(x2d, ((0, rows_p - rows), (0, 0)))

    b1_2d = b1.reshape(1, inter)
    b2_2d = b2.reshape(1, hidden)
    gamma_2d = gamma.reshape(1, hidden)
    beta_2d = beta.reshape(1, hidden)

    if tk == inter:
        # nk == 1: fused path, no accumulator scratch.
        out2d = pl.pallas_call(
            functools.partial(_ffn_fused_kernel, eps=eps),
            out_shape=jax.ShapeDtypeStruct((rows_p, hidden), x.dtype),
            grid_spec=pltpu.PrefetchScalarGridSpec(
                num_scalar_prefetch=0,
                grid=(rows_p // tm,),
                in_specs=[
                    pl.BlockSpec((tm, hidden), lambda i: (i, 0)),
                    pl.BlockSpec((hidden, inter), lambda i: (0, 0)),
                    pl.BlockSpec((1, inter), lambda i: (0, 0)),
                    pl.BlockSpec((inter, hidden), lambda i: (0, 0)),
                    pl.BlockSpec((1, hidden), lambda i: (0, 0)),
                    pl.BlockSpec((1, hidden), lambda i: (0, 0)),
                    pl.BlockSpec((1, hidden), lambda i: (0, 0)),
                ],
                out_specs=pl.BlockSpec((tm, hidden), lambda i: (i, 0)),
            ),
            compiler_params=pltpu.CompilerParams(
                dimension_semantics=("parallel",),
                vmem_limit_bytes=vmem_limit,
            ),
        )(x2d, w1, b1_2d, w2, b2_2d, gamma_2d, beta_2d)
    else:
        out2d = pl.pallas_call(
            functools.partial(_ffn_ktiled_kernel, eps=eps),
            out_shape=jax.ShapeDtypeStruct((rows_p, hidden), x.dtype),
            grid_spec=pltpu.PrefetchScalarGridSpec(
                num_scalar_prefetch=0,
                grid=(rows_p // tm, inter // tk),
                in_specs=[
                    pl.BlockSpec((tm, hidden), lambda i, k: (i, 0)),  # x (resident over k)
                    pl.BlockSpec((hidden, tk), lambda i, k: (0, k)),  # W1 k-slice
                    pl.BlockSpec((1, tk), lambda i, k: (0, k)),       # b1 k-slice
                    pl.BlockSpec((tk, hidden), lambda i, k: (k, 0)),  # W2 k-slice
                    pl.BlockSpec((1, hidden), lambda i, k: (0, 0)),   # b2
                    pl.BlockSpec((1, hidden), lambda i, k: (0, 0)),   # gamma
                    pl.BlockSpec((1, hidden), lambda i, k: (0, 0)),   # beta
                ],
                out_specs=pl.BlockSpec((tm, hidden), lambda i, k: (i, 0)),
                scratch_shapes=[pltpu.VMEM((tm, hidden), jnp.float32)],
            ),
            compiler_params=pltpu.CompilerParams(
                dimension_semantics=("parallel", "arbitrary"),
                vmem_limit_bytes=vmem_limit,
            ),
        )(x2d, w1, b1_2d, w2, b2_2d, gamma_2d, beta_2d)

    if rows_p != rows:
        out2d = out2d[:rows]
    return out2d.reshape(batch, seq, hidden)


def _reference(x, w1, b1, w2, b2, gamma, beta, eps):
    h = jnp.maximum(x @ w1 + b1, 0.0)
    y = h @ w2 + b2 + x
    mean = jnp.mean(y, axis=-1, keepdims=True)
    var = jnp.mean((y - mean) ** 2, axis=-1, keepdims=True)
    return (y - mean) / jnp.sqrt(var + eps) * gamma + beta


if __name__ == "__main__":
    layer_norm_eps = 1e-12
    batch, seq = 2, 8

    # --- shipped config: hidden_size=32, intermediate_size=64 (lane-packed path)
    hidden_size, intermediate_size = 32, 64
    key = jax.random.PRNGKey(0)
    kx, kw1, kw2, kb1, kb2, kg, kb = jax.random.split(key, 7)
    x = jax.random.normal(kx, (batch, seq, hidden_size), dtype=jnp.float32)
    w1 = 0.02 * jax.random.normal(kw1, (hidden_size, intermediate_size), jnp.float32)
    b1 = 0.1 * jax.random.normal(kb1, (intermediate_size,), jnp.float32)
    w2 = 0.02 * jax.random.normal(kw2, (intermediate_size, hidden_size), jnp.float32)
    b2 = 0.1 * jax.random.normal(kb2, (hidden_size,), jnp.float32)
    gamma = 1.0 + 0.1 * jax.random.normal(kg, (hidden_size,), jnp.float32)
    beta = 0.1 * jax.random.normal(kb, (hidden_size,), jnp.float32)

    out = ffn_adapter_forward(x, w1, b1, w2, b2, gamma, beta, eps=layer_norm_eps)
    out = jax.block_until_ready(out)
    ref = _reference(x, w1, b1, w2, b2, gamma, beta, layer_norm_eps)
    assert out.shape == (batch, seq, hidden_size)
    assert jnp.allclose(out, ref, atol=2e-5, rtol=2e-5), "packed path mismatch"

    # --- hidden >= 128: exercises the general fused (nk==1) and K-tiled paths.
    h2, i2 = 128, 256
    kx2, kw3, kw4, kb3, kb4, kg2, kbe2 = jax.random.split(jax.random.PRNGKey(1), 7)
    x2 = jax.random.normal(kx2, (batch, seq, h2), dtype=jnp.float32)
    w1b = 0.02 * jax.random.normal(kw3, (h2, i2), jnp.float32)
    b1b = 0.1 * jax.random.normal(kb3, (i2,), jnp.float32)
    w2b = 0.02 * jax.random.normal(kw4, (i2, h2), jnp.float32)
    b2b = 0.1 * jax.random.normal(kb4, (h2,), jnp.float32)
    g2 = 1.0 + 0.1 * jax.random.normal(kg2, (h2,), jnp.float32)
    be2 = 0.1 * jax.random.normal(kbe2, (h2,), jnp.float32)
    ref2 = _reference(x2, w1b, b1b, w2b, b2b, g2, be2, layer_norm_eps)

    out_fused = jax.block_until_ready(
        ffn_adapter_forward(x2, w1b, b1b, w2b, b2b, g2, be2, eps=layer_norm_eps))
    assert jnp.allclose(out_fused, ref2, atol=2e-5, rtol=2e-5), "fused path mismatch"

    out_ktiled = jax.block_until_ready(
        ffn_adapter_forward(x2, w1b, b1b, w2b, b2b, g2, be2,
                            eps=layer_norm_eps, max_k_tile=128))
    assert jnp.allclose(out_ktiled, ref2, atol=2e-5, rtol=2e-5), "K-tiled path mismatch"

    print("KERNEL_OK")
</pallas_src>

<mosaic_0001>
module attributes {stable_mosaic.version = 11 : i64} {
  func.func @_ffn_packed_kernel(%arg0: i32, %arg1: memref<8x128xf32, #tpu.memory_space<vmem>>, %arg2: memref<128x256xf32, #tpu.memory_space<vmem>>, %arg3: memref<1x256xf32, #tpu.memory_space<vmem>>, %arg4: memref<256x128xf32, #tpu.memory_space<vmem>>, %arg5: memref<1x128xf32, #tpu.memory_space<vmem>>, %arg6: memref<1x128xf32, #tpu.memory_space<vmem>>, %arg7: memref<1x128xf32, #tpu.memory_space<vmem>>, %arg8: memref<128x128xf32, #tpu.memory_space<vmem>>, %arg9: memref<8x128xf32, #tpu.memory_space<vmem>>) attributes {dimension_semantics = [#tpu.dimension_semantics<parallel>], iteration_bounds = array<i64: 1>, scalar_prefetch = 0 : i64, scratch_operands = 0 : i64, tpu.core_type = #tpu.core_type<tc>, window_params = [{transform_indices = @transform_0, window_bounds = array<i64: 8, 128>}, {pipeline_mode = #tpu.pipeline_mode<synchronous>, transform_indices = @transform_1, window_bounds = array<i64: 128, 256>}, {pipeline_mode = #tpu.pipeline_mode<synchronous>, transform_indices = @transform_2, window_bounds = array<i64: 1, 256>}, {pipeline_mode = #tpu.pipeline_mode<synchronous>, transform_indices = @transform_3, window_bounds = array<i64: 256, 128>}, {pipeline_mode = #tpu.pipeline_mode<synchronous>, transform_indices = @transform_4, window_bounds = array<i64: 1, 128>}, {pipeline_mode = #tpu.pipeline_mode<synchronous>, transform_indices = @transform_5, window_bounds = array<i64: 1, 128>}, {pipeline_mode = #tpu.pipeline_mode<synchronous>, transform_indices = @transform_6, window_bounds = array<i64: 1, 128>}, {pipeline_mode = #tpu.pipeline_mode<synchronous>, transform_indices = @transform_7, window_bounds = array<i64: 128, 128>}, {transform_indices = @transform_8, window_bounds = array<i64: 8, 128>}]} {
    %c0 = arith.constant 0 : index
    %c0_0 = arith.constant 0 : index
    %0 = vector.load %arg1[%c0, %c0_0] : memref<8x128xf32, #tpu.memory_space<vmem>>, vector<8x128xf32>
    %c0_1 = arith.constant 0 : index
    %c0_2 = arith.constant 0 : index
    %1 = vector.load %arg2[%c0_1, %c0_2] : memref<128x256xf32, #tpu.memory_space<vmem>>, vector<128x256xf32>
    %cst = arith.constant dense<0.000000e+00> : vector<8x256xf32>
    %2 = tpu.matmul %0, %1, %cst {dimension_numbers = #tpu.dot_dimension_numbers<[1], [0], [0], [1], [0, 0, 1, 1], [], []>} : vector<8x128xf32>, vector<128x256xf32>, vector<8x256xf32> -> vector<8x256xf32>
    %c0_3 = arith.constant 0 : index
    %c0_4 = arith.constant 0 : index
    %3 = vector.load %arg3[%c0_3, %c0_4] : memref<1x256xf32, #tpu.memory_space<vmem>>, vector<1x256xf32>
    %4 = vector.broadcast %3 : vector<1x256xf32> to vector<8x256xf32>
    %5 = arith.addf %2, %4 : vector<8x256xf32>
    %cst_5 = arith.constant 0.000000e+00 : f32
    %6 = vector.broadcast %cst_5 : f32 to vector<8x256xf32>
    %7 = arith.maximumf %5, %6 : vector<8x256xf32>
    %c0_6 = arith.constant 0 : index
    %c0_7 = arith.constant 0 : index
    %8 = vector.load %arg4[%c0_6, %c0_7] : memref<256x128xf32, #tpu.memory_space<vmem>>, vector<256x128xf32>
    %cst_8 = arith.constant dense<0.000000e+00> : vector<8x128xf32>
    %9 = tpu.matmul %7, %8, %cst_8 {dimension_numbers = #tpu.dot_dimension_numbers<[1], [0], [0], [1], [0, 0, 1, 1], [], []>} : vector<8x256xf32>, vector<256x128xf32>, vector<8x128xf32> -> vector<8x128xf32>
    %c0_9 = arith.constant 0 : index
    %c0_10 = arith.constant 0 : index
    %10 = vector.load %arg5[%c0_9, %c0_10] : memref<1x128xf32, #tpu.memory_space<vmem>>, vector<1x128xf32>
    %11 = vector.broadcast %10 : vector<1x128xf32> to vector<8x128xf32>
    %12 = arith.addf %9, %11 : vector<8x128xf32>
    %13 = arith.addf %12, %0 : vector<8x128xf32>
    %c0_11 = arith.constant 0 : index
    %c0_12 = arith.constant 0 : index
    %14 = vector.load %arg8[%c0_11, %c0_12] : memref<128x128xf32, #tpu.memory_space<vmem>>, vector<128x128xf32>
    %15 = arith.truncf %13 : vector<8x128xf32> to vector<8x128xbf16>
    %16 = arith.extf %15 : vector<8x128xbf16> to vector<8x128xf32>
    %17 = arith.subf %13, %16 : vector<8x128xf32>
    %cst_13 = arith.constant dense<0.000000e+00> : vector<8x128xf32>
    %18 = tpu.matmul %16, %14, %cst_13 {dimension_numbers = #tpu.dot_dimension_numbers<[1], [0], [0], [1], [0, 0, 1, 1], [], []>} : vector<8x128xf32>, vector<128x128xf32>, vector<8x128xf32> -> vector<8x128xf32>
    %cst_14 = arith.constant dense<0.000000e+00> : vector<8x128xf32>
    %19 = tpu.matmul %17, %14, %cst_14 {dimension_numbers = #tpu.dot_dimension_numbers<[1], [0], [0], [1], [0, 0, 1, 1], [], []>} : vector<8x128xf32>, vector<128x128xf32>, vector<8x128xf32> -> vector<8x128xf32>
    %20 = arith.addf %18, %19 : vector<8x128xf32>
    %cst_15 = arith.constant 3.125000e-02 : f32
    %21 = vector.broadcast %cst_15 : f32 to vector<8x128xf32>
    %22 = arith.mulf %20, %21 : vector<8x128xf32>
    %23 = arith.subf %13, %22 : vector<8x128xf32>
    %24 = arith.mulf %23, %23 : vector<8x128xf32>
    %25 = arith.truncf %24 : vector<8x128xf32> to vector<8x128xbf16>
    %26 = arith.extf %25 : vector<8x128xbf16> to vector<8x128xf32>
    %27 = arith.subf %24, %26 : vector<8x128xf32>
    %cst_16 = arith.constant dense<0.000000e+00> : vector<8x128xf32>
    %28 = tpu.matmul %26, %14, %cst_16 {dimension_numbers = #tpu.dot_dimension_numbers<[1], [0], [0], [1], [0, 0, 1, 1], [], []>} : vector<8x128xf32>, vector<128x128xf32>, vector<8x128xf32> -> vector<8x128xf32>
    %cst_17 = arith.constant dense<0.000000e+00> : vector<8x128xf32>
    %29 = tpu.matmul %27, %14, %cst_17 {dimension_numbers = #tpu.dot_dimension_numbers<[1], [0], [0], [1], [0, 0, 1, 1], [], []>} : vector<8x128xf32>, vector<128x128xf32>, vector<8x128xf32> -> vector<8x128xf32>
    %30 = arith.addf %28, %29 : vector<8x128xf32>
    %cst_18 = arith.constant 3.125000e-02 : f32
    %31 = vector.broadcast %cst_18 : f32 to vector<8x128xf32>
    %32 = arith.mulf %30, %31 : vector<8x128xf32>
    %cst_19 = arith.constant 9.99999996E-13 : f32
    %33 = vector.broadcast %cst_19 : f32 to vector<8x128xf32>
    %34 = arith.addf %32, %33 : vector<8x128xf32>
    %35 = math.rsqrt %34 : vector<8x128xf32>
    %36 = arith.mulf %23, %35 : vector<8x128xf32>
    %c0_20 = arith.constant 0 : index
    %c0_21 = arith.constant 0 : index
    %37 = vector.load %arg6[%c0_20, %c0_21] : memref<1x128xf32, #tpu.memory_space<vmem>>, vector<1x128xf32>
    %38 = vector.broadcast %37 : vector<1x128xf32> to vector<8x128xf32>
    %39 = arith.mulf %36, %38 : vector<8x128xf32>
    %c0_22 = arith.constant 0 : index
    %c0_23 = arith.constant 0 : index
    %40 = vector.load %arg7[%c0_22, %c0_23] : memref<1x128xf32, #tpu.memory_space<vmem>>, vector<1x128xf32>
    %41 = vector.broadcast %40 : vector<1x128xf32> to vector<8x128xf32>
    %42 = arith.addf %39, %41 : vector<8x128xf32>
    %c0_24 = arith.constant 0 : index
    %c0_25 = arith.constant 0 : index
    %43 = vector.load %arg9[%c0_24, %c0_25] : memref<8x128xf32, #tpu.memory_space<vmem>>, vector<8x128xf32>
    tpu.vector_store %arg9[%c0_24, %c0_25], %42 {strides = array<i32>} : memref<8x128xf32, #tpu.memory_space<vmem>>, vector<8x128xf32>,
    return
  }
  func.func @transform_0(%arg0: i32) -> (i32, i32) {
    %c0_i32 = arith.constant 0 : i32
    %c0_i32_0 = arith.constant 0 : i32
    return %arg0, %c0_i32 : i32, i32
  }
  func.func @transform_1(%arg0: i32) -> (i32, i32) {
    %c0_i32 = arith.constant 0 : i32
    %c0_i32_0 = arith.constant 0 : i32
    %c0_i32_1 = arith.constant 0 : i32
    return %c0_i32, %c0_i32_0 : i32, i32
  }
  func.func @transform_2(%arg0: i32) -> (i32, i32) {
    %c0_i32 = arith.constant 0 : i32
    %c0_i32_0 = arith.constant 0 : i32
    %c0_i32_1 = arith.constant 0 : i32
    return %c0_i32, %c0_i32_0 : i32, i32
  }
  func.func @transform_3(%arg0: i32) -> (i32, i32) {
    %c0_i32 = arith.constant 0 : i32
    %c0_i32_0 = arith.constant 0 : i32
    %c0_i32_1 = arith.constant 0 : i32
    return %c0_i32, %c0_i32_0 : i32, i32
  }
  func.func @transform_4(%arg0: i32) -> (i32, i32) {
    %c0_i32 = arith.constant 0 : i32
    %c0_i32_0 = arith.constant 0 : i32
    %c0_i32_1 = arith.constant 0 : i32
    return %c0_i32, %c0_i32_0 : i32, i32
  }
  func.func @transform_5(%arg0: i32) -> (i32, i32) {
    %c0_i32 = arith.constant 0 : i32
    %c0_i32_0 = arith.constant 0 : i32
    %c0_i32_1 = arith.constant 0 : i32
    return %c0_i32, %c0_i32_0 : i32, i32
  }
  func.func @transform_6(%arg0: i32) -> (i32, i32) {
    %c0_i32 = arith.constant 0 : i32
    %c0_i32_0 = arith.constant 0 : i32
    %c0_i32_1 = arith.constant 0 : i32
    return %c0_i32, %c0_i32_0 : i32, i32
  }
  func.func @transform_7(%arg0: i32) -> (i32, i32) {
    %c0_i32 = arith.constant 0 : i32
    %c0_i32_0 = arith.constant 0 : i32
    %c0_i32_1 = arith.constant 0 : i32
    return %c0_i32, %c0_i32_0 : i32, i32
  }
  func.func @transform_8(%arg0: i32) -> (i32, i32) {
    %c0_i32 = arith.constant 0 : i32
    %c0_i32_0 = arith.constant 0 : i32
    return %arg0, %c0_i32 : i32, i32
  }
}

</mosaic_0001>

<llo_original>
// kernel: tpu_custom_call.1
$region0: #{tpu_custom_call.1}
  #allocation0 [shape = 'u32[]', space=smem, size = 0x4, offset = 0x4, fixed_abs, tag = 'smem constant byte address 0x4 - core index']
  #allocation1 [shape = 'u32[144,128]{1,0:T(1,128)}', space=vmem, size = 0x12000, scoped, tag = 'internal scratch']
  %s0 = inlined_call_operand.hbm [shape: f32[8,128], index: 0, kind: input, shape index: {}]
  %s1 = inlined_call_operand.hbm [shape: f32[128,256], index: 1, kind: input, shape index: {}]
  %s2 = inlined_call_operand.vmem [shape: f32[1,256], index: 2, kind: input, shape index: {}]
  %s3 = inlined_call_operand.hbm [shape: f32[256,128], index: 3, kind: input, shape index: {}]
  %s4 = inlined_call_operand.vmem [shape: f32[1,128], index: 4, kind: input, shape index: {}]
  %s5 = inlined_call_operand.vmem [shape: f32[1,128], index: 5, kind: input, shape index: {}]
  %s6 = inlined_call_operand.vmem [shape: f32[1,128], index: 6, kind: input, shape index: {}]
  %s7 = inlined_call_operand.hbm [shape: f32[128,128], index: 7, kind: input, shape index: {}]
  %s8 = inlined_call_operand.hbm [shape: f32[8,128], index: 8, kind: output, shape index: {}]
  %s9 = sld [smem:[#allocation0]]
  $region58: #{tpu_custom_call.1} parent=0
    _
  %s11 = ssub.s32 1, %s9
  %s12 = scalar_select 0, %s11, %s9
  $region1: #{tpu_custom_call.1} parent=0
    #allocation2 [shape = 'u8[4096]{0}', space=vmem, size = 0x1000, scoped, tag = 'input window, operand 0, single buffered']
    #allocation3 [shape = 's32[1]{0}', space=sflag, size = 0x4, scoped, tag = 'scoped memory for tpu_custom_call.1']
    #allocation4 [shape = 's32[1]{0}', space=sflag, size = 0x4, scoped, tag = 'scoped memory for tpu_custom_call.1']
    #allocation5 [shape = 'u8[131072]{0}', space=vmem, size = 0x20000, scoped, tag = 'input window, operand 1, single buffered']
    #allocation6 [shape = 's32[1]{0}', space=sflag, size = 0x4, scoped, tag = 'scoped memory for tpu_custom_call.1']
    #allocation7 [shape = 'u8[131072]{0}', space=vmem, size = 0x20000, scoped, tag = 'input window, operand 3, single buffered']
    #allocation8 [shape = 'u8[65536]{0}', space=vmem, size = 0x10000, scoped, tag = 'input window, operand 7, single buffered']
    #allocation9 [shape = 's32[1]{0}', space=sflag, size = 0x4, scoped, tag = 'scoped memory for tpu_custom_call.1']
    #allocation10 [shape = 'u8[4096]{0}', space=vmem, size = 0x1000, scoped, tag = 'output window, operand 0, single buffered']
    %13 = vsyncpa [#allocation3], 0
    %14 = vsyncpa [#allocation6], 0
    %15 = vsyncpa [#allocation9], 0
    %16 = vsyncpa [#allocation4], 0
    // Predicated region
    $region2: #{tpu_custom_call.1} parent=1 // pred_check
      _
    $region3: #{tpu_custom_call.1} parent=1 // pred_check_branch
      %18 = sbr.rel (0) target = $region5
    $region4: #{tpu_custom_call.1} parent=1 // pred_region
      %s20 = ssub.s32 128, 128
      %21 = vsyncadd [#allocation3], %s20
      %s23 = sshll.u32 [#allocation2], 4
      %s24 = int_to_ptr.vmem [resolvable:$true] %s23
      %26 = dma.hbm_to_vmem [thread:$0]  %s0, 128, %s24, [#allocation3]
    $region5: #{tpu_custom_call.1} parent=1 // pred_fallthru
      _
    // Predicated region
    $region6: #{tpu_custom_call.1} parent=1 // pred_check
      _
    $region7: #{tpu_custom_call.1} parent=1 // pred_check_branch
      %28 = sbr.rel (0) target = $region9
    $region8: #{tpu_custom_call.1} parent=1 // pred_region
      %s30 = ssub.s32 4096, 4096
      %31 = vsyncadd [#allocation6], %s30
      %s32 = sshll.u32 [#allocation5], 4
      %s33 = int_to_ptr.vmem [resolvable:$true] %s32
      %38 = dma.hbm_to_vmem [thread:$0]  %s1, 4096, %s33, [#allocation6], 256, 256, 16
    $region9: #{tpu_custom_call.1} parent=1 // pred_fallthru
      _
    // Predicated region
    $region10: #{tpu_custom_call.1} parent=1 // pred_check
      _
    $region11: #{tpu_custom_call.1} parent=1 // pred_check_branch
      %40 = sbr.rel (0) target = $region13
    $region12: #{tpu_custom_call.1} parent=1 // pred_region
      _
    $region13: #{tpu_custom_call.1} parent=1 // pred_fallthru
      _
    // Predicated region
    $region14: #{tpu_custom_call.1} parent=1 // pred_check
      _
    $region15: #{tpu_custom_call.1} parent=1 // pred_check_branch
      %42 = sbr.rel (0) target = $region17
    $region16: #{tpu_custom_call.1} parent=1 // pred_region
      %s44 = ssub.s32 4096, 4096
      %45 = vsyncadd [#allocation6], %s44
      %s46 = sshll.u32 [#allocation7], 4
      %s47 = int_to_ptr.vmem [resolvable:$true] %s46
      %52 = dma.hbm_to_vmem [thread:$0]  %s3, 4096, %s47, [#allocation6], 128, 128, 8
    $region17: #{tpu_custom_call.1} parent=1 // pred_fallthru
      _
    // Predicated region
    $region18: #{tpu_custom_call.1} parent=1 // pred_check
      _
    $region19: #{tpu_custom_call.1} parent=1 // pred_check_branch
      %54 = sbr.rel (0) target = $region21
    $region20: #{tpu_custom_call.1} parent=1 // pred_region
      _
    $region21: #{tpu_custom_call.1} parent=1 // pred_fallthru
      _
    // Predicated region
    $region22: #{tpu_custom_call.1} parent=1 // pred_check
      _
    $region23: #{tpu_custom_call.1} parent=1 // pred_check_branch
      %56 = sbr.rel (0) target = $region25
    $region24: #{tpu_custom_call.1} parent=1 // pred_region
      _
    $region25: #{tpu_custom_call.1} parent=1 // pred_fallthru
      _
    // Predicated region
    $region26: #{tpu_custom_call.1} parent=1 // pred_check
      _
    $region27: #{tpu_custom_call.1} parent=1 // pred_check_branch
      %58 = sbr.rel (0) target = $region29
    $region28: #{tpu_custom_call.1} parent=1 // pred_region
      _
    $region29: #{tpu_custom_call.1} parent=1 // pred_fallthru
      _
    // Predicated region
    $region30: #{tpu_custom_call.1} parent=1 // pred_check
      _
    $region31: #{tpu_custom_call.1} parent=1 // pred_check_branch
      %60 = sbr.rel (0) target = $region33
    $region32: #{tpu_custom_call.1} parent=1 // pred_region
      %s62 = ssub.s32 2048, 2048
      %63 = vsyncadd [#allocation9], %s62
      %s64 = sshll.u32 [#allocation8], 4
      %s65 = int_to_ptr.vmem [resolvable:$true] %s64
      %70 = dma.hbm_to_vmem [thread:$0]  %s7, 2048, %s65, [#allocation9], 128, 128, 8
    $region33: #{tpu_custom_call.1} parent=1 // pred_fallthru
      _
    // Predicated region
    $region34: #{tpu_custom_call.1} parent=1 // pred_check
      _
    $region35: #{tpu_custom_call.1} parent=1 // pred_check_branch
      %72 = sbr.rel (0) target = $region37
    $region36: #{tpu_custom_call.1} parent=1 // pred_region
      %73 = dma.done [#allocation3], 128
    $region37: #{tpu_custom_call.1} parent=1 // pred_fallthru
      _
    // Predicated region
    $region38: #{tpu_custom_call.1} parent=1 // pred_check
      _
    $region39: #{tpu_custom_call.1} parent=1 // pred_check_branch
      %75 = sbr.rel (0) target = $region41
    $region40: #{tpu_custom_call.1} parent=1 // pred_region
      %76 = dma.done [#allocation6], 4096
    $region41: #{tpu_custom_call.1} parent=1 // pred_fallthru
      _
    // Predicated region
    $region42: #{tpu_custom_call.1} parent=1 // pred_check
      _
    $region43: #{tpu_custom_call.1} parent=1 // pred_check_branch
      %78 = sbr.rel (0) target = $region45
    $region44: #{tpu_custom_call.1} parent=1 // pred_region
      %79 = dma.done [#allocation6], 4096
    $region45: #{tpu_custom_call.1} parent=1 // pred_fallthru
      _
    // Predicated region
    $region46: #{tpu_custom_call.1} parent=1 // pred_check
      _
    $region47: #{tpu_custom_call.1} parent=1 // pred_check_branch
      %81 = sbr.rel (0) target = $region49
    $region48: #{tpu_custom_call.1} parent=1 // pred_region
      %82 = dma.done [#allocation9], 2048
    $region49: #{tpu_custom_call.1} parent=1 // pred_fallthru
      _
    %v83 = vld [vmem:[#allocation2] sm:$0xff]
    %v84 = vld [vmem:[#allocation5] sm:$0xff]
    %v85 = vld [vmem:[#allocation5 + $0x8] sm:$0xff]
    %v86 = vld [vmem:[#allocation5 + $0x10] sm:$0xff]
    %v87 = vld [vmem:[#allocation5 + $0x18] sm:$0xff]
    %v88 = vld [vmem:[#allocation5 + $0x20] sm:$0xff]
    %v89 = vld [vmem:[#allocation5 + $0x28] sm:$0xff]
    %v90 = vld [vmem:[#allocation5 + $0x30] sm:$0xff]
    %v91 = vld [vmem:[#allocation5 + $0x38] sm:$0xff]
    %v92 = vld [vmem:[#allocation5 + $0x40] sm:$0xff]
    %v93 = vld [vmem:[#allocation5 + $0x48] sm:$0xff]
    %v94 = vld [vmem:[#allocation5 + $0x50] sm:$0xff]
    %v95 = vld [vmem:[#allocation5 + $0x58] sm:$0xff]
    %v96 = vld [vmem:[#allocation5 + $0x60] sm:$0xff]
    %v97 = vld [vmem:[#allocation5 + $0x68] sm:$0xff]
    %v98 = vld [vmem:[#allocation5 + $0x70] sm:$0xff]
    %v99 = vld [vmem:[#allocation5 + $0x78] sm:$0xff]
    %v100 = vld [vmem:[#allocation5 + $0x80] sm:$0xff]
    %v101 = vld [vmem:[#allocation5 + $0x88] sm:$0xff]
    %v102 = vld [vmem:[#allocation5 + $0x90] sm:$0xff]
    %v103 = vld [vmem:[#allocation5 + $0x98] sm:$0xff]
    %v104 = vld [vmem:[#allocation5 + $0xa0] sm:$0xff]
    %v105 = vld [vmem:[#allocation5 + $0xa8] sm:$0xff]
    %v106 = vld [vmem:[#allocation5 + $0xb0] sm:$0xff]
    %v107 = vld [vmem:[#allocation5 + $0xb8] sm:$0xff]
    %v108 = vld [vmem:[#allocation5 + $0xc0] sm:$0xff]
    %v109 = vld [vmem:[#allocation5 + $0xc8] sm:$0xff]
    %v110 = vld [vmem:[#allocation5 + $0xd0] sm:$0xff]
    %v111 = vld [vmem:[#allocation5 + $0xd8] sm:$0xff]
    %v112 = vld [vmem:[#allocation5 + $0xe0] sm:$0xff]
    %v113 = vld [vmem:[#allocation5 + $0xe8] sm:$0xff]
    %v114 = vld [vmem:[#allocation5 + $0xf0] sm:$0xff]
    %v115 = vld [vmem:[#allocation5 + $0xf8] sm:$0xff]
    %v116 = vld [vmem:[%s2] sm:$0x3]
    %v118 = vlaneseq
    %v119 = vshrl.u32 %v118, 7
    %v120 = vsub.s32 0, %v119
    %v121 = vrot.slane %v116, %v120
    %v122 = vlaneseq
    %v123 = vshrl.u32 %v122, 7
    %v124 = vsub.s32 1, %v123
    %v125 = vrot.slane %v116, %v124
    %128 = vmatprep.subr.mxu0 %v115
    %129 = vmatpush1.msra.mxu0 %v114
    %130 = vmatprep.subr.mxu0 %v113
    %131 = vmatpush1.msra.mxu0 %v112
    %132 = vmatprep.subr.mxu0 %v111
    %133 = vmatpush1.msra.mxu0 %v110
    %134 = vmatprep.subr.mxu0 %v109
    %135 = vmatpush1.msra.mxu0 %v108
    %136 = vmatprep.subr.mxu0 %v107
    %137 = vmatpush1.msra.mxu0 %v106
    %138 = vmatprep.subr.mxu0 %v105
    %139 = vmatpush1.msra.mxu0 %v104
    %140 = vmatprep.subr.mxu0 %v103
    %141 = vmatpush1.msra.mxu0 %v102
    %142 = vmatprep.subr.mxu0 %v101
    %143 = vmatpush1.msra.mxu0 %v100
    %144 = vmatprep.subr.mxu0 %v99
    %145 = vmatpush1.msra.mxu0 %v98
    %146 = vmatprep.subr.mxu0 %v97
    %147 = vmatpush1.msra.mxu0 %v96
    %148 = vmatprep.subr.mxu0 %v95
    %149 = vmatpush1.msra.mxu0 %v94
    %150 = vmatprep.subr.mxu0 %v93
    %151 = vmatpush1.msra.mxu0 %v92
    %152 = vmatprep.subr.mxu0 %v91
    %153 = vmatpush1.msra.mxu0 %v90
    %154 = vmatprep.subr.mxu0 %v89
    %155 = vmatpush1.msra.mxu0 %v88
    %156 = vmatprep.subr.mxu0 %v87
    %157 = vmatpush1.msra.mxu0 %v86
    %158 = vmatprep.subr.mxu0 %v85
    %159 = vmatpush1.msra.mxu0 %v84
    %160 = vmatprep.subr.mxu0 0.0
    %161 = vmatpush2.msra.mxu0 0.0
    %162 = vmatprep.subr.mxu0 0.0
    %163 = vmatpush2.msra.mxu0 0.0
    %164 = vmatprep.subr.mxu0 0.0
    %165 = vmatpush2.msra.mxu0 0.0
    %166 = vmatprep.subr.mxu0 0.0
    %167 = vmatpush2.msra.mxu0 0.0
    %168 = vmatprep.subr.mxu0 0.0
    %169 = vmatpush2.msra.mxu0 0.0
    %170 = vmatprep.subr.mxu0 0.0
    %171 = vmatpush2.msra.mxu0 0.0
    %172 = vmatprep.subr.mxu0 0.0
    %173 = vmatpush2.msra.mxu0 0.0
    %174 = vmatprep.subr.mxu0 0.0
    %175 = vmatpush2.msra.mxu0 0.0
    %176 = vmatprep.subr.mxu0 0.0
    %177 = vmatpush2.msra.mxu0 0.0
    %178 = vmatprep.subr.mxu0 0.0
    %179 = vmatpush2.msra.mxu0 0.0
    %180 = vmatprep.subr.mxu0 0.0
    %181 = vmatpush2.msra.mxu0 0.0
    %182 = vmatprep.subr.mxu0 0.0
    %183 = vmatpush2.msra.mxu0 0.0
    %184 = vmatprep.subr.mxu0 0.0
    %185 = vmatpush2.msra.mxu0 0.0
    %186 = vmatprep.subr.mxu0 0.0
    %187 = vmatpush2.msra.mxu0 0.0
    %188 = vmatprep.subr.mxu0 0.0
    %189 = vmatpush2.msra.mxu0 0.0
    %190 = vmatprep.subr.mxu0 0.0
    %191 = vmatpush2.msra.mxu0 0.0
    %192 = vmatprep.mubr.f32.mxu0 0.0
    %193 = vmatmul.mubr.f32.gmra.mxu0 %v83
    %v194 = vpop.f32.mrf.mxu0
    %v195 = vadd.f32 %v121, %v194
    %v196 = vpop.f32.mrf.mxu0
    %v197 = vadd.f32 %v125, %v196
    %198 = vdwg.mxu0
    %v199 = vmax.f32 %v195, 0.0
    %v200 = vmax.f32 %v197, 0.0
    %v201 = vld [vmem:[#allocation7] sm:$0xff]
    %v202 = vld [vmem:[#allocation7 + $0x8] sm:$0xff]
    %v203 = vld [vmem:[#allocation7 + $0x10] sm:$0xff]
    %v204 = vld [vmem:[#allocation7 + $0x18] sm:$0xff]
    %v205 = vld [vmem:[#allocation7 + $0x20] sm:$0xff]
    %v206 = vld [vmem:[#allocation7 + $0x28] sm:$0xff]
    %v207 = vld [vmem:[#allocation7 + $0x30] sm:$0xff]
    %v208 = vld [vmem:[#allocation7 + $0x38] sm:$0xff]
    %v209 = vld [vmem:[#allocation7 + $0x40] sm:$0xff]
    %v210 = vld [vmem:[#allocation7 + $0x48] sm:$0xff]
    %v211 = vld [vmem:[#allocation7 + $0x50] sm:$0xff]
    %v212 = vld [vmem:[#allocation7 + $0x58] sm:$0xff]
    %v213 = vld [vmem:[#allocation7 + $0x60] sm:$0xff]
    %v214 = vld [vmem:[#allocation7 + $0x68] sm:$0xff]
    %v215 = vld [vmem:[#allocation7 + $0x70] sm:$0xff]
    %v216 = vld [vmem:[#allocation7 + $0x78] sm:$0xff]
    %v217 = vld [vmem:[#allocation7 + $0x80] sm:$0xff]
    %v218 = vld [vmem:[#allocation7 + $0x88] sm:$0xff]
    %v219 = vld [vmem:[#allocation7 + $0x90] sm:$0xff]
    %v220 = vld [vmem:[#allocation7 + $0x98] sm:$0xff]
    %v221 = vld [vmem:[#allocation7 + $0xa0] sm:$0xff]
    %v222 = vld [vmem:[#allocation7 + $0xa8] sm:$0xff]
    %v223 = vld [vmem:[#allocation7 + $0xb0] sm:$0xff]
    %v224 = vld [vmem:[#allocation7 + $0xb8] sm:$0xff]
    %v225 = vld [vmem:[#allocation7 + $0xc0] sm:$0xff]
    %v226 = vld [vmem:[#allocation7 + $0xc8] sm:$0xff]
    %v227 = vld [vmem:[#allocation7 + $0xd0] sm:$0xff]
    %v228 = vld [vmem:[#allocation7 + $0xd8] sm:$0xff]
    %v229 = vld [vmem:[#allocation7 + $0xe0] sm:$0xff]
    %v230 = vld [vmem:[#allocation7 + $0xe8] sm:$0xff]
    %v231 = vld [vmem:[#allocation7 + $0xf0] sm:$0xff]
    %v232 = vld [vmem:[#allocation7 + $0xf8] sm:$0xff]
    %v233 = vld [vmem:[%s4] sm:$0x1]
    %v235 = vlaneseq
    %v236 = vshrl.u32 %v235, 7
    %v237 = vsub.s32 0, %v236
    %v238 = vrot.slane %v233, %v237
    %240 = vmatprep.subr.mxu0 0.0
    %241 = vmatpush1.msra.mxu0 %v216
    %242 = vmatprep.subr.mxu0 0.0
    %243 = vmatpush1.msra.mxu0 %v215
    %244 = vmatprep.subr.mxu0 0.0
    %245 = vmatpush1.msra.mxu0 %v214
    %246 = vmatprep.subr.mxu0 0.0
    %247 = vmatpush1.msra.mxu0 %v213
    %248 = vmatprep.subr.mxu0 0.0
    %249 = vmatpush1.msra.mxu0 %v212
    %250 = vmatprep.subr.mxu0 0.0
    %251 = vmatpush1.msra.mxu0 %v211
    %252 = vmatprep.subr.mxu0 0.0
    %253 = vmatpush1.msra.mxu0 %v210
    %254 = vmatprep.subr.mxu0 0.0
    %255 = vmatpush1.msra.mxu0 %v209
    %256 = vmatprep.subr.mxu0 0.0
    %257 = vmatpush1.msra.mxu0 %v208
    %258 = vmatprep.subr.mxu0 0.0
    %259 = vmatpush1.msra.mxu0 %v207
    %260 = vmatprep.subr.mxu0 0.0
    %261 = vmatpush1.msra.mxu0 %v206
    %262 = vmatprep.subr.mxu0 0.0
    %263 = vmatpush1.msra.mxu0 %v205
    %264 = vmatprep.subr.mxu0 0.0
    %265 = vmatpush1.msra.mxu0 %v204
    %266 = vmatprep.subr.mxu0 0.0
    %267 = vmatpush1.msra.mxu0 %v203
    %268 = vmatprep.subr.mxu0 0.0
    %269 = vmatpush1.msra.mxu0 %v202
    %270 = vmatprep.subr.mxu0 0.0
    %271 = vmatpush1.msra.mxu0 %v201
    %272 = vmatprep.subr.mxu0 0.0
    %273 = vmatpush2.msra.mxu0 %v232
    %274 = vmatprep.subr.mxu0 0.0
    %275 = vmatpush2.msra.mxu0 %v231
    %276 = vmatprep.subr.mxu0 0.0
    %277 = vmatpush2.msra.mxu0 %v230
    %278 = vmatprep.subr.mxu0 0.0
    %279 = vmatpush2.msra.mxu0 %v229
    %280 = vmatprep.subr.mxu0 0.0
    %281 = vmatpush2.msra.mxu0 %v228
    %282 = vmatprep.subr.mxu0 0.0
    %283 = vmatpush2.msra.mxu0 %v227
    %284 = vmatprep.subr.mxu0 0.0
    %285 = vmatpush2.msra.mxu0 %v226
    %286 = vmatprep.subr.mxu0 0.0
    %287 = vmatpush2.msra.mxu0 %v225
    %288 = vmatprep.subr.mxu0 0.0
    %289 = vmatpush2.msra.mxu0 %v224
    %290 = vmatprep.subr.mxu0 0.0
    %291 = vmatpush2.msra.mxu0 %v223
    %292 = vmatprep.subr.mxu0 0.0
    %293 = vmatpush2.msra.mxu0 %v222
    %294 = vmatprep.subr.mxu0 0.0
    %295 = vmatpush2.msra.mxu0 %v221
    %296 = vmatprep.subr.mxu0 0.0
    %297 = vmatpush2.msra.mxu0 %v220
    %298 = vmatprep.subr.mxu0 0.0
    %299 = vmatpush2.msra.mxu0 %v219
    %300 = vmatprep.subr.mxu0 0.0
    %301 = vmatpush2.msra.mxu0 %v218
    %302 = vmatprep.subr.mxu0 0.0
    %303 = vmatpush2.msra.mxu0 %v217
    %304 = vmatprep.mubr.f32.mxu0 %v200
    %305 = vmatmul.mubr.f32.gmra.mxu0 %v199
    %v306 = vpop.f32.mrf.mxu0
    %v307 = vadd.f32 %v238, %v306
    %v308 = vpop.f32.mrf.mxu0
    %309 = vdwg.mxu0
    %v310 = vadd.f32 %v307, %v83
    %v311 = vld [vmem:[#allocation8] sm:$0xff]
    %v312 = vld [vmem:[#allocation8 + $0x8] sm:$0xff]
    %v313 = vld [vmem:[#allocation8 + $0x10] sm:$0xff]
    %v314 = vld [vmem:[#allocation8 + $0x18] sm:$0xff]
    %v315 = vld [vmem:[#allocation8 + $0x20] sm:$0xff]
    %v316 = vld [vmem:[#allocation8 + $0x28] sm:$0xff]
    %v317 = vld [vmem:[#allocation8 + $0x30] sm:$0xff]
    %v318 = vld [vmem:[#allocation8 + $0x38] sm:$0xff]
    %v319 = vld [vmem:[#allocation8 + $0x40] sm:$0xff]
    %v320 = vld [vmem:[#allocation8 + $0x48] sm:$0xff]
    %v321 = vld [vmem:[#allocation8 + $0x50] sm:$0xff]
    %v322 = vld [vmem:[#allocation8 + $0x58] sm:$0xff]
    %v323 = vld [vmem:[#allocation8 + $0x60] sm:$0xff]
    %v324 = vld [vmem:[#allocation8 + $0x68] sm:$0xff]
    %v325 = vld [vmem:[#allocation8 + $0x70] sm:$0xff]
    %v326 = vld [vmem:[#allocation8 + $0x78] sm:$0xff]
    %v327 = vpack.c.bf16 %v310, %v310
    %v328 = vunpack.c.l.bf16 %v327
    %v329 = vsub.f32 %v310, %v328
    %330 = vmatprep.subr.mxu0 0.0
    %331 = vmatpush1.msra.mxu0 %v326
    %332 = vmatprep.subr.mxu0 0.0
    %333 = vmatpush1.msra.mxu0 %v325
    %334 = vmatprep.subr.mxu0 0.0
    %335 = vmatpush1.msra.mxu0 %v324
    %336 = vmatprep.subr.mxu0 0.0
    %337 = vmatpush1.msra.mxu0 %v323
    %338 = vmatprep.subr.mxu0 0.0
    %339 = vmatpush1.msra.mxu0 %v322
    %340 = vmatprep.subr.mxu0 0.0
    %341 = vmatpush1.msra.mxu0 %v321
    %342 = vmatprep.subr.mxu0 0.0
    %343 = vmatpush1.msra.mxu0 %v320
    %344 = vmatprep.subr.mxu0 0.0
    %345 = vmatpush1.msra.mxu0 %v319
    %346 = vmatprep.subr.mxu0 0.0
    %347 = vmatpush1.msra.mxu0 %v318
    %348 = vmatprep.subr.mxu0 0.0
    %349 = vmatpush1.msra.mxu0 %v317
    %350 = vmatprep.subr.mxu0 0.0
    %351 = vmatpush1.msra.mxu0 %v316
    %352 = vmatprep.subr.mxu0 0.0
    %353 = vmatpush1.msra.mxu0 %v315
    %354 = vmatprep.subr.mxu0 0.0
    %355 = vmatpush1.msra.mxu0 %v314
    %356 = vmatprep.subr.mxu0 0.0
    %357 = vmatpush1.msra.mxu0 %v313
    %358 = vmatprep.subr.mxu0 0.0
    %359 = vmatpush1.msra.mxu0 %v312
    %360 = vmatprep.subr.mxu0 0.0
    %361 = vmatpush1.msra.mxu0 %v311
    %362 = vmatprep.subr.mxu0 0.0
    %363 = vmatpush2.msra.mxu0 0.0
    %364 = vmatprep.subr.mxu0 0.0
    %365 = vmatpush2.msra.mxu0 0.0
    %366 = vmatprep.subr.mxu0 0.0
    %367 = vmatpush2.msra.mxu0 0.0
    %368 = vmatprep.subr.mxu0 0.0
    %369 = vmatpush2.msra.mxu0 0.0
    %370 = vmatprep.subr.mxu0 0.0
    %371 = vmatpush2.msra.mxu0 0.0
    %372 = vmatprep.subr.mxu0 0.0
    %373 = vmatpush2.msra.mxu0 0.0
    %374 = vmatprep.subr.mxu0 0.0
    %375 = vmatpush2.msra.mxu0 0.0
    %376 = vmatprep.subr.mxu0 0.0
    %377 = vmatpush2.msra.mxu0 0.0
    %378 = vmatprep.subr.mxu0 0.0
    %379 = vmatpush2.msra.mxu0 0.0
    %380 = vmatprep.subr.mxu0 0.0
    %381 = vmatpush2.msra.mxu0 0.0
    %382 = vmatprep.subr.mxu0 0.0
    %383 = vmatpush2.msra.mxu0 0.0
    %384 = vmatprep.subr.mxu0 0.0
    %385 = vmatpush2.msra.mxu0 0.0
    %386 = vmatprep.subr.mxu0 0.0
    %387 = vmatpush2.msra.mxu0 0.0
    %388 = vmatprep.subr.mxu0 0.0
    %389 = vmatpush2.msra.mxu0 0.0
    %390 = vmatprep.subr.mxu0 0.0
    %391 = vmatpush2.msra.mxu0 0.0
    %392 = vmatprep.subr.mxu0 0.0
    %393 = vmatpush2.msra.mxu0 0.0
    %394 = vmatprep.mubr.f32.mxu0 0.0
    %395 = vmatmul.mubr.f32.gmra.mxu0 %v329
    %v396 = vpop.f32.mrf.mxu0
    %v397 = vadd.f32 0.0, %v396
    %v398 = vpop.f32.mrf.mxu0
    %399 = vdwg.mxu0
    %400 = vmatprep.subr.mxu0 0.0
    %401 = vmatpush1.msra.mxu0 %v326
    %402 = vmatprep.subr.mxu0 0.0
    %403 = vmatpush1.msra.mxu0 %v325
    %404 = vmatprep.subr.mxu0 0.0
    %405 = vmatpush1.msra.mxu0 %v324
    %406 = vmatprep.subr.mxu0 0.0
    %407 = vmatpush1.msra.mxu0 %v323
    %408 = vmatprep.subr.mxu0 0.0
    %409 = vmatpush1.msra.mxu0 %v322
    %410 = vmatprep.subr.mxu0 0.0
    %411 = vmatpush1.msra.mxu0 %v321
    %412 = vmatprep.subr.mxu0 0.0
    %413 = vmatpush1.msra.mxu0 %v320
    %414 = vmatprep.subr.mxu0 0.0
    %415 = vmatpush1.msra.mxu0 %v319
    %416 = vmatprep.subr.mxu0 0.0
    %417 = vmatpush1.msra.mxu0 %v318
    %418 = vmatprep.subr.mxu0 0.0
    %419 = vmatpush1.msra.mxu0 %v317
    %420 = vmatprep.subr.mxu0 0.0
    %421 = vmatpush1.msra.mxu0 %v316
    %422 = vmatprep.subr.mxu0 0.0
    %423 = vmatpush1.msra.mxu0 %v315
    %424 = vmatprep.subr.mxu0 0.0
    %425 = vmatpush1.msra.mxu0 %v314
    %426 = vmatprep.subr.mxu0 0.0
    %427 = vmatpush1.msra.mxu0 %v313
    %428 = vmatprep.subr.mxu0 0.0
    %429 = vmatpush1.msra.mxu0 %v312
    %430 = vmatprep.subr.mxu0 0.0
    %431 = vmatpush1.msra.mxu0 %v311
    %432 = vmatprep.subr.mxu0 0.0
    %433 = vmatpush2.msra.mxu0 0.0
    %434 = vmatprep.subr.mxu0 0.0
    %435 = vmatpush2.msra.mxu0 0.0
    %436 = vmatprep.subr.mxu0 0.0
    %437 = vmatpush2.msra.mxu0 0.0
    %438 = vmatprep.subr.mxu0 0.0
    %439 = vmatpush2.msra.mxu0 0.0
    %440 = vmatprep.subr.mxu0 0.0
    %441 = vmatpush2.msra.mxu0 0.0
    %442 = vmatprep.subr.mxu0 0.0
    %443 = vmatpush2.msra.mxu0 0.0
    %444 = vmatprep.subr.mxu0 0.0
    %445 = vmatpush2.msra.mxu0 0.0
    %446 = vmatprep.subr.mxu0 0.0
    %447 = vmatpush2.msra.mxu0 0.0
    %448 = vmatprep.subr.mxu0 0.0
    %449 = vmatpush2.msra.mxu0 0.0
    %450 = vmatprep.subr.mxu0 0.0
    %451 = vmatpush2.msra.mxu0 0.0
    %452 = vmatprep.subr.mxu0 0.0
    %453 = vmatpush2.msra.mxu0 0.0
    %454 = vmatprep.subr.mxu0 0.0
    %455 = vmatpush2.msra.mxu0 0.0
    %456 = vmatprep.subr.mxu0 0.0
    %457 = vmatpush2.msra.mxu0 0.0
    %458 = vmatprep.subr.mxu0 0.0
    %459 = vmatpush2.msra.mxu0 0.0
    %460 = vmatprep.subr.mxu0 0.0
    %461 = vmatpush2.msra.mxu0 0.0
    %462 = vmatprep.subr.mxu0 0.0
    %463 = vmatpush2.msra.mxu0 0.0
    %464 = vmatprep.mubr.f32.mxu0 0.0
    %465 = vmatmul.mubr.f32.gmra.mxu0 %v328
    %v466 = vpop.f32.mrf.mxu0
    %v467 = vadd.f32 %v397, %v466
    %v468 = vpop.f32.mrf.mxu0
    %469 = vdwg.mxu0
    %v470 = vmul.f32 %v467, 0.03125
    %v471 = vsub.f32 %v310, %v470
    %v472 = vmul.f32 %v471, %v471
    %v473 = vpack.c.bf16 %v472, %v472
    %v474 = vunpack.c.l.bf16 %v473
    %v475 = vsub.f32 %v472, %v474
    %476 = vmatprep.subr.mxu0 0.0
    %477 = vmatpush1.msra.mxu0 %v326
    %478 = vmatprep.subr.mxu0 0.0
    %479 = vmatpush1.msra.mxu0 %v325
    %480 = vmatprep.subr.mxu0 0.0
    %481 = vmatpush1.msra.mxu0 %v324
    %482 = vmatprep.subr.mxu0 0.0
    %483 = vmatpush1.msra.mxu0 %v323
    %484 = vmatprep.subr.mxu0 0.0
    %485 = vmatpush1.msra.mxu0 %v322
    %486 = vmatprep.subr.mxu0 0.0
    %487 = vmatpush1.msra.mxu0 %v321
    %488 = vmatprep.subr.mxu0 0.0
    %489 = vmatpush1.msra.mxu0 %v320
    %490 = vmatprep.subr.mxu0 0.0
    %491 = vmatpush1.msra.mxu0 %v319
    %492 = vmatprep.subr.mxu0 0.0
    %493 = vmatpush1.msra.mxu0 %v318
    %494 = vmatprep.subr.mxu0 0.0
    %495 = vmatpush1.msra.mxu0 %v317
    %496 = vmatprep.subr.mxu0 0.0
    %497 = vmatpush1.msra.mxu0 %v316
    %498 = vmatprep.subr.mxu0 0.0
    %499 = vmatpush1.msra.mxu0 %v315
    %500 = vmatprep.subr.mxu0 0.0
    %501 = vmatpush1.msra.mxu0 %v314
    %502 = vmatprep.subr.mxu0 0.0
    %503 = vmatpush1.msra.mxu0 %v313
    %504 = vmatprep.subr.mxu0 0.0
    %505 = vmatpush1.msra.mxu0 %v312
    %506 = vmatprep.subr.mxu0 0.0
    %507 = vmatpush1.msra.mxu0 %v311
    %508 = vmatprep.subr.mxu0 0.0
    %509 = vmatpush2.msra.mxu0 0.0
    %510 = vmatprep.subr.mxu0 0.0
    %511 = vmatpush2.msra.mxu0 0.0
    %512 = vmatprep.subr.mxu0 0.0
    %513 = vmatpush2.msra.mxu0 0.0
    %514 = vmatprep.subr.mxu0 0.0
    %515 = vmatpush2.msra.mxu0 0.0
    %516 = vmatprep.subr.mxu0 0.0
    %517 = vmatpush2.msra.mxu0 0.0
    %518 = vmatprep.subr.mxu0 0.0
    %519 = vmatpush2.msra.mxu0 0.0
    %520 = vmatprep.subr.mxu0 0.0
    %521 = vmatpush2.msra.mxu0 0.0
    %522 = vmatprep.subr.mxu0 0.0
    %523 = vmatpush2.msra.mxu0 0.0
    %524 = vmatprep.subr.mxu0 0.0
    %525 = vmatpush2.msra.mxu0 0.0
    %526 = vmatprep.subr.mxu0 0.0
    %527 = vmatpush2.msra.mxu0 0.0
    %528 = vmatprep.subr.mxu0 0.0
    %529 = vmatpush2.msra.mxu0 0.0
    %530 = vmatprep.subr.mxu0 0.0
    %531 = vmatpush2.msra.mxu0 0.0
    %532 = vmatprep.subr.mxu0 0.0
    %533 = vmatpush2.msra.mxu0 0.0
    %534 = vmatprep.subr.mxu0 0.0
    %535 = vmatpush2.msra.mxu0 0.0
    %536 = vmatprep.subr.mxu0 0.0
    %537 = vmatpush2.msra.mxu0 0.0
    %538 = vmatprep.subr.mxu0 0.0
    %539 = vmatpush2.msra.mxu0 0.0
    %540 = vmatprep.mubr.f32.mxu0 0.0
    %541 = vmatmul.mubr.f32.gmra.mxu0 %v475
    %v542 = vpop.f32.mrf.mxu0
    %v543 = vadd.f32 0.0, %v542
    %v544 = vpop.f32.mrf.mxu0
    %545 = vdwg.mxu0
    %546 = vmatprep.subr.mxu0 0.0
    %547 = vmatpush1.msra.mxu0 %v326
    %548 = vmatprep.subr.mxu0 0.0
    %549 = vmatpush1.msra.mxu0 %v325
    %550 = vmatprep.subr.mxu0 0.0
    %551 = vmatpush1.msra.mxu0 %v324
    %552 = vmatprep.subr.mxu0 0.0
    %553 = vmatpush1.msra.mxu0 %v323
    %554 = vmatprep.subr.mxu0 0.0
    %555 = vmatpush1.msra.mxu0 %v322
    %556 = vmatprep.subr.mxu0 0.0
    %557 = vmatpush1.msra.mxu0 %v321
    %558 = vmatprep.subr.mxu0 0.0
    %559 = vmatpush1.msra.mxu0 %v320
    %560 = vmatprep.subr.mxu0 0.0
    %561 = vmatpush1.msra.mxu0 %v319
    %562 = vmatprep.subr.mxu0 0.0
    %563 = vmatpush1.msra.mxu0 %v318
    %564 = vmatprep.subr.mxu0 0.0
    %565 = vmatpush1.msra.mxu0 %v317
    %566 = vmatprep.subr.mxu0 0.0
    %567 = vmatpush1.msra.mxu0 %v316
    %568 = vmatprep.subr.mxu0 0.0
    %569 = vmatpush1.msra.mxu0 %v315
    %570 = vmatprep.subr.mxu0 0.0
    %571 = vmatpush1.msra.mxu0 %v314
    %572 = vmatprep.subr.mxu0 0.0
    %573 = vmatpush1.msra.mxu0 %v313
    %574 = vmatprep.subr.mxu0 0.0
    %575 = vmatpush1.msra.mxu0 %v312
    %576 = vmatprep.subr.mxu0 0.0
    %577 = vmatpush1.msra.mxu0 %v311
    %578 = vmatprep.subr.mxu0 0.0
    %579 = vmatpush2.msra.mxu0 0.0
    %580 = vmatprep.subr.mxu0 0.0
    %581 = vmatpush2.msra.mxu0 0.0
    %582 = vmatprep.subr.mxu0 0.0
    %583 = vmatpush2.msra.mxu0 0.0
    %584 = vmatprep.subr.mxu0 0.0
    %585 = vmatpush2.msra.mxu0 0.0
    %586 = vmatprep.subr.mxu0 0.0
    %587 = vmatpush2.msra.mxu0 0.0
    %588 = vmatprep.subr.mxu0 0.0
    %589 = vmatpush2.msra.mxu0 0.0
    %590 = vmatprep.subr.mxu0 0.0
    %591 = vmatpush2.msra.mxu0 0.0
    %592 = vmatprep.subr.mxu0 0.0
    %593 = vmatpush2.msra.mxu0 0.0
    %594 = vmatprep.subr.mxu0 0.0
    %595 = vmatpush2.msra.mxu0 0.0
    %596 = vmatprep.subr.mxu0 0.0
    %597 = vmatpush2.msra.mxu0 0.0
    %598 = vmatprep.subr.mxu0 0.0
    %599 = vmatpush2.msra.mxu0 0.0
    %600 = vmatprep.subr.mxu0 0.0
    %601 = vmatpush2.msra.mxu0 0.0
    %602 = vmatprep.subr.mxu0 0.0
    %603 = vmatpush2.msra.mxu0 0.0
    %604 = vmatprep.subr.mxu0 0.0
    %605 = vmatpush2.msra.mxu0 0.0
    %606 = vmatprep.subr.mxu0 0.0
    %607 = vmatpush2.msra.mxu0 0.0
    %608 = vmatprep.subr.mxu0 0.0
    %609 = vmatpush2.msra.mxu0 0.0
    %610 = vmatprep.mubr.f32.mxu0 0.0
    %611 = vmatmul.mubr.f32.gmra.mxu0 %v474
    %v612 = vpop.f32.mrf.mxu0
    %v613 = vadd.f32 %v543, %v612
    %v614 = vpop.f32.mrf.mxu0
    %615 = vdwg.mxu0
    %v616 = vmul.f32 %v613, 0.03125
    %v617 = vadd.f32 %v616, 1e-12
    %v618 = vrsqrt.pop %v617
    %v619 = vmul.f32 %v471, %v618
    %v620 = vld [vmem:[%s5] sm:$0x1]
    %v622 = vlaneseq
    %v623 = vshrl.u32 %v622, 7
    %v624 = vsub.s32 0, %v623
    %v625 = vrot.slane %v620, %v624
    %v627 = vmul.f32 %v619, %v625
    %v628 = vld [vmem:[%s6] sm:$0x1]
    %v630 = vlaneseq
    %v631 = vshrl.u32 %v630, 7
    %v632 = vsub.s32 0, %v631
    %v633 = vrot.slane %v628, %v632
    %v635 = vadd.f32 %v627, %v633
    %636 = vst [vmem:[#allocation10] sm:$0xff] %v635
    // Predicated region
    $region50: #{tpu_custom_call.1} parent=1 // pred_check
      _
    $region51: #{tpu_custom_call.1} parent=1 // pred_check_branch
      %638 = sbr.rel (0) target = $region53
    $region52: #{tpu_custom_call.1} parent=1 // pred_region
      %s640 = ssub.s32 128, 128
      %641 = vsyncadd [#allocation4], %s640
      %s643 = sshll.u32 [#allocation10], 4
      %s644 = int_to_ptr.vmem [resolvable:$true] %s643
      %646 = dma.vmem_to_hbm [thread:$0]  %s644, 128, %s8, [#allocation4]
    $region53: #{tpu_custom_call.1} parent=1 // pred_fallthru
      _
    // Predicated region
    $region54: #{tpu_custom_call.1} parent=1 // pred_check
      _
    $region55: #{tpu_custom_call.1} parent=1 // pred_check_branch
      %648 = sbr.rel (0) target = $region57
    $region56: #{tpu_custom_call.1} parent=1 // pred_region
      %649 = dma.done [#allocation4], 128
    $region57: #{tpu_custom_call.1} parent=1 // pred_fallthru
      _
    %650 = vsyncpa [#allocation3], 1
    %651 = vsyncpa [#allocation6], 1
    %652 = vsyncpa [#allocation9], 1
    %653 = vsyncpa [#allocation4], 1

</llo_original>
